<compile_context>
chip_gen: v7x
topology: tpu7x:2x2x1
jax: 0.10.0
libtpu: 0.0.40
codegen_flags: <defaults>
</compile_context>

<pallas_src>
import functools

import numpy as np
import jax
import jax.numpy as jnp
from jax.experimental import pallas as pl
from jax.experimental.pallas import tpu as pltpu


def tree_layer_kernel(x_ref, xinit_ref, w_ref, out_ref, *, inv_b, inv_bm1):
    # Single fused matmul on the MXU (bf16 inputs, f32 accumulation).
    y = jnp.dot(x_ref[...], w_ref[...], preferred_element_type=jnp.float32)
    y = y + xinit_ref[...]                                    # [B, TN] f32

    # Actnorm-style data-dependent init of treeBias / treeScale.
    # TODO(synk): actinorm_init_bias / actinorm_init_scale are not defined in
    # the reference file; in the PyTorch module they are *one-time* data
    # dependent initializations that become fixed parameters afterwards. This
    # kernel implements the first-forward (init) behavior:
    #   bias = per-feature batch mean, scale**2 = 1/(std + eps).
    tree_bias = jnp.sum(y, axis=0, keepdims=True) * inv_b     # [1, TN]
    centered = y - tree_bias
    var = jnp.sum(centered * centered, axis=0, keepdims=True) * inv_bm1  # unbiased (torch.std)
    std = jnp.sqrt(var)
    scale_sq = pl.reciprocal(std + 1e-6, approx=True)         # == treeScale ** 2  (EUP)

    # default acti_func is Sigmoid (exp also goes to the EUP slot)
    out_ref[...] = jax.nn.sigmoid(centered * scale_sq)


def prepare_tree_layer_weights(tree_w, tree_mask, breeze_w, breeze_mask):
    """Hoisted, x-independent weight prep ('no strict' mode):
       W = (treeWeights**2) * treeMask + breezeBiasWeights * breezeMask, cast to bf16."""
    w = (tree_w * tree_w) * tree_mask + breeze_w * breeze_mask
    return w.astype(jnp.bfloat16)


def _pick_col_tile(B, in_size, out_padded, budget_bytes=24 * 1024 * 1024):
    """Largest 128-multiple column tile dividing out_padded that fits the VMEM
    budget; prefer tiles giving >= 2 grid steps so DMA/compute/writeback pipeline."""

    def tile_bytes(tn):
        return (in_size * tn * 2 * 2          # bf16 weight tile, double-buffered
                + B * tn * 4 * 2 * 2          # f32 x_init + out tiles, double-buffered
                + B * in_size * 2)            # resident bf16 x (single buffer)

    candidates = [t for t in range(128, out_padded + 1, 128)
                  if out_padded % t == 0 and tile_bytes(t) <= budget_bytes]
    if not candidates:
        return 128
    multi_step = [t for t in candidates if out_padded // t >= 2]
    return max(multi_step) if multi_step else max(candidates)


def tree_layer_forward(x, x_init, w_fused):
    B, in_size = x.shape
    out_size = w_fused.shape[1]

    # Pad the output-feature axis to a multiple of 128 lanes -> unmasked stores.
    out_pad = (-out_size) % 128
    if out_pad:
        w_fused = jnp.pad(w_fused, ((0, 0), (0, out_pad)))
        x_init = jnp.pad(x_init, ((0, 0), (0, out_pad)))
    out_padded = out_size + out_pad

    tn = _pick_col_tile(B, in_size, out_padded)

    x_bf16 = x.astype(jnp.bfloat16)
    x_init = x_init.astype(jnp.float32)

    kernel = functools.partial(
        tree_layer_kernel, inv_b=1.0 / B, inv_bm1=1.0 / max(B - 1, 1)
    )

    out = pl.pallas_call(
        kernel,
        out_shape=jax.ShapeDtypeStruct((B, out_padded), jnp.float32),
        grid=(out_padded // tn,),
        in_specs=[
            pl.BlockSpec((B, in_size), lambda j: (0, 0)),   # x: resident across all tiles
            pl.BlockSpec((B, tn), lambda j: (0, j)),        # x_init tile
            pl.BlockSpec((in_size, tn), lambda j: (0, j)),  # fused bf16 weight tile
        ],
        out_specs=pl.BlockSpec((B, tn), lambda j: (0, j)),
        compiler_params=pltpu.CompilerParams(
            dimension_semantics=("parallel",),              # 2 TCs on v7x
            vmem_limit_bytes=32 * 1024 * 1024,
        ),
    )(x_bf16, x_init, w_fused)

    return out[:, :out_size] if out_pad else out


def tree_layer_reference(x, x_init, tree_w, tree_mask, breeze_w, breeze_mask):
    """Pure-JAX f32 reference of the same forward ('no strict', first-forward actnorm init)."""
    w = (tree_w * tree_w) * tree_mask + breeze_w * breeze_mask
    y = x @ w + x_init
    b = x.shape[0]
    bias = jnp.mean(y, axis=0, keepdims=True)
    var = jnp.sum((y - bias) ** 2, axis=0, keepdims=True) / max(b - 1, 1)
    scale_sq = 1.0 / (jnp.sqrt(var) + 1e-6)
    return jax.nn.sigmoid((y - bias) * scale_sq)


def init_tree_layer_params(key, input_shape, output_shape):
    """Deterministic parameter init mirroring TreeLayer.__init__ / init_mask ('no strict')."""
    in_size = int(sum(input_shape))
    out_size = int(sum(output_shape))
    z_dim = len(input_shape)
    k_tree, k_breeze = jax.random.split(key)

    # treeWeights = sqrt(|randn(in,out)| / sqrt(in_size / z_dim))   ('no strict')
    tree_w = jnp.sqrt(
        jnp.abs(jax.random.normal(k_tree, (in_size, out_size), jnp.float32))
        / np.sqrt(in_size / z_dim)
    )

    # block-diagonal tree mask
    tree_mask = np.zeros((in_size, out_size), np.float32)
    br, bc = 0, 0
    for isz, osz in zip(input_shape, output_shape):
        tree_mask[br:br + isz, bc:bc + osz] = 1.0
        br += isz
        bc += osz

    # block-triangular breeze mask + breezeBiasWeights init
    breeze_mask = np.zeros((in_size, out_size), np.float32)
    breeze_w = np.zeros((in_size, out_size), np.float32)
    br, bc = 0, output_shape[0]
    sub_keys = jax.random.split(k_breeze, max(len(output_shape) - 1, 1))
    for idx, (isz, osz) in enumerate(zip(input_shape, output_shape[1:])):
        rows = br + isz
        breeze_mask[0:rows, bc:bc + osz] = 1.0
        breeze_w[0:rows, bc:bc + osz] = (
            np.asarray(jax.random.normal(sub_keys[idx], (rows, osz), jnp.float32))
            / np.sqrt(rows)
        )
        br += isz
        bc += osz

    return (
        tree_w,
        jnp.asarray(tree_mask),
        jnp.asarray(breeze_w),
        jnp.asarray(breeze_mask),
    )


if __name__ == "__main__":
    # Small shapes consistent with the module: per-dimension widths.
    input_shape = [32, 32, 32, 32]    # in_size  = 128
    output_shape = [96, 96, 96, 96]   # out_size = 384  -> 3 column tiles of 128
    B = 16

    key = jax.random.PRNGKey(0)
    k_params, k_x, k_xi = jax.random.split(key, 3)

    tree_w, tree_mask, breeze_w, breeze_mask = init_tree_layer_params(
        k_params, input_shape, output_shape
    )

    x = jax.random.normal(k_x, (B, sum(input_shape)), jnp.float32)
    x_init = jax.random.normal(k_xi, (B, sum(output_shape)), jnp.float32)

    # One-time, x-independent fused weight prep (mask + square + combine + bf16 cast).
    w_fused = prepare_tree_layer_weights(tree_w, tree_mask, breeze_w, breeze_mask)

    out = tree_layer_forward(x, x_init, w_fused)
    out = jax.block_until_ready(out)

    # Sanity + correctness vs pure-JAX f32 reference (bf16 matmul + approx recip tolerance).
    ref = tree_layer_reference(x, x_init, tree_w, tree_mask, breeze_w, breeze_mask)
    ref = jax.block_until_ready(ref)

    assert out.shape == (B, sum(output_shape))
    assert bool(jnp.all(jnp.isfinite(out)))
    assert bool(jnp.all((out >= 0.0) & (out <= 1.0)))          # sigmoid output range
    max_err = float(jnp.max(jnp.abs(out - ref)))
    assert max_err < 5e-2, f"max abs error vs reference too large: {max_err}"

    print("KERNEL_OK")
</pallas_src>

<mosaic_0001>
module attributes {stable_mosaic.version = 11 : i64} {
  func.func @tree_layer_kernel(%arg0: i32, %arg1: memref<16x128xbf16, #tpu.memory_space<vmem>>, %arg2: memref<16x128xf32, #tpu.memory_space<vmem>>, %arg3: memref<128x128xbf16, #tpu.memory_space<vmem>>, %arg4: memref<16x128xf32, #tpu.memory_space<vmem>>) attributes {dimension_semantics = [#tpu.dimension_semantics<parallel>], iteration_bounds = array<i64: 3>, scalar_prefetch = 0 : i64, scratch_operands = 0 : i64, tpu.core_type = #tpu.core_type<tc>, window_params = [{pipeline_mode = #tpu.pipeline_mode<synchronous>, transform_indices = @transform_0, window_bounds = array<i64: 16, 128>}, {transform_indices = @transform_1, window_bounds = array<i64: 16, 128>}, {transform_indices = @transform_2, window_bounds = array<i64: 128, 128>}, {transform_indices = @transform_3, window_bounds = array<i64: 16, 128>}]} {
    %c0 = arith.constant 0 : index
    %c0_0 = arith.constant 0 : index
    %0 = vector.load %arg1[%c0, %c0_0] : memref<16x128xbf16, #tpu.memory_space<vmem>>, vector<16x128xbf16>
    %c0_1 = arith.constant 0 : index
    %c0_2 = arith.constant 0 : index
    %1 = vector.load %arg3[%c0_1, %c0_2] : memref<128x128xbf16, #tpu.memory_space<vmem>>, vector<128x128xbf16>
    %cst = arith.constant dense<0.000000e+00> : vector<16x128xf32>
    %2 = tpu.matmul %0, %1, %cst {dimension_numbers = #tpu.dot_dimension_numbers<[1], [0], [0], [1], [0, 0, 1, 1], [], []>} : vector<16x128xbf16>, vector<128x128xbf16>, vector<16x128xf32> -> vector<16x128xf32>
    %c0_3 = arith.constant 0 : index
    %c0_4 = arith.constant 0 : index
    %3 = vector.load %arg2[%c0_3, %c0_4] : memref<16x128xf32, #tpu.memory_space<vmem>>, vector<16x128xf32>
    %4 = arith.addf %2, %3 : vector<16x128xf32>
    %cst_5 = arith.constant dense<0.000000e+00> : vector<128xf32>
    %5 = vector.multi_reduction <add>, %4, %cst_5 [0] : vector<16x128xf32> to vector<128xf32>
    %6 = vector.shape_cast %5 : vector<128xf32> to vector<1x128xf32>
    %cst_6 = arith.constant 6.250000e-02 : f32
    %7 = vector.broadcast %cst_6 : f32 to vector<1x128xf32>
    %8 = arith.mulf %6, %7 : vector<1x128xf32>
    %9 = vector.broadcast %8 : vector<1x128xf32> to vector<16x128xf32>
    %10 = arith.subf %4, %9 : vector<16x128xf32>
    %11 = arith.mulf %10, %10 : vector<16x128xf32>
    %cst_7 = arith.constant dense<0.000000e+00> : vector<128xf32>
    %12 = vector.multi_reduction <add>, %11, %cst_7 [0] : vector<16x128xf32> to vector<128xf32>
    %13 = vector.shape_cast %12 : vector<128xf32> to vector<1x128xf32>
    %cst_8 = arith.constant 0.0666666701 : f32
    %14 = vector.broadcast %cst_8 : f32 to vector<1x128xf32>
    %15 = arith.mulf %13, %14 : vector<1x128xf32>
    %16 = math.sqrt %15 : vector<1x128xf32>
    %cst_9 = arith.constant 9.99999997E-7 : f32
    %17 = vector.broadcast %cst_9 : f32 to vector<1x128xf32>
    %18 = arith.addf %16, %17 : vector<1x128xf32>
    %19 = tpu.reciprocal %18 {approx = true} : vector<1x128xf32> -> vector<1x128xf32>
    %20 = vector.broadcast %19 : vector<1x128xf32> to vector<16x128xf32>
    %21 = arith.mulf %10, %20 : vector<16x128xf32>
    %22 = arith.negf %21 : vector<16x128xf32>
    %23 = math.exp %22 : vector<16x128xf32>
    %cst_10 = arith.constant 1.000000e+00 : f32
    %24 = vector.broadcast %cst_10 : f32 to vector<16x128xf32>
    %25 = arith.addf %24, %23 : vector<16x128xf32>
    %26 = arith.divf %24, %25 : vector<16x128xf32>
    %c0_11 = arith.constant 0 : index
    %c0_12 = arith.constant 0 : index
    %27 = vector.load %arg4[%c0_11, %c0_12] : memref<16x128xf32, #tpu.memory_space<vmem>>, vector<16x128xf32>
    tpu.vector_store %arg4[%c0_11, %c0_12], %26 {strides = array<i32>} : memref<16x128xf32, #tpu.memory_space<vmem>>, vector<16x128xf32>,
    return
  }
  func.func @transform_0(%arg0: i32) -> (i32, i32) {
    %c0_i32 = arith.constant 0 : i32
    %c0_i32_0 = arith.constant 0 : i32
    %c0_i32_1 = arith.constant 0 : i32
    return %c0_i32, %c0_i32_0 : i32, i32
  }
  func.func @transform_1(%arg0: i32) -> (i32, i32) {
    %c0_i32 = arith.constant 0 : i32
    %c0_i32_0 = arith.constant 0 : i32
    return %c0_i32, %arg0 : i32, i32
  }
  func.func @transform_2(%arg0: i32) -> (i32, i32) {
    %c0_i32 = arith.constant 0 : i32
    %c0_i32_0 = arith.constant 0 : i32
    return %c0_i32, %arg0 : i32, i32
  }
  func.func @transform_3(%arg0: i32) -> (i32, i32) {
    %c0_i32 = arith.constant 0 : i32
    %c0_i32_0 = arith.constant 0 : i32
    return %c0_i32, %arg0 : i32, i32
  }
}

</mosaic_0001>

<llo_original>
// kernel: tpu_custom_call.1
$region0: #{tpu_custom_call.1}
  #allocation0 [shape = 'u32[]', space=smem, size = 0x4, offset = 0x4, fixed_abs, tag = 'smem constant byte address 0x4 - core index']
  #allocation1 [shape = 'u32[144,128]{1,0:T(1,128)}', space=vmem, size = 0x12000, scoped, tag = 'internal scratch']
  %s0 = inlined_call_operand.hbm [shape: bf16[16,128], index: 0, kind: input, shape index: {}]
  %s1 = inlined_call_operand.hbm [shape: f32[16,384], index: 1, kind: input, shape index: {}]
  %s2 = inlined_call_operand.hbm [shape: bf16[128,384], index: 2, kind: input, shape index: {}]
  %s3 = inlined_call_operand.hbm [shape: f32[16,384], index: 3, kind: output, shape index: {}]
  %s4 = sld [smem:[#allocation0]]
  $region57: #{tpu_custom_call.1} parent=0
    _
  %s6 = ssub.s32 1, %s4
  %s7 = scalar_select 0, %s6, %s4
  $region1: #{tpu_custom_call.1} parent=0
    #allocation2 [shape = 'u8[4096]{0}', space=vmem, size = 0x1000, scoped, tag = 'input window, operand 0, single buffered']
    #allocation3 [shape = 's32[2]{0}', space=sflag, size = 0x8, scoped, tag = 'scoped memory for tpu_custom_call.1']
    #allocation4 [shape = 's32[2]{0}', space=sflag, size = 0x8, scoped, tag = 'scoped memory for tpu_custom_call.1']
    #allocation5 [shape = 'u8[16384]{0}', space=vmem, size = 0x4000, scoped, tag = 'input window, operand 1']
    #allocation6 [shape = 's32[2]{0}', space=sflag, size = 0x8, scoped, tag = 'scoped memory for tpu_custom_call.1']
    #allocation7 [shape = 'u8[65536]{0}', space=vmem, size = 0x10000, scoped, tag = 'input window, operand 2']
    #allocation8 [shape = 'u8[16384]{0}', space=vmem, size = 0x4000, scoped, tag = 'output window, operand 0']
    %8 = vsyncpa [#allocation3], 0
    %9 = vsyncpa [#allocation6], 0
    %s10 = scalar_lea.sflag [#allocation6], 1
    %11 = vsyncpa %s10, 0
    %12 = vsyncpa [#allocation4], 0
    %s13 = scalar_lea.sflag [#allocation4], 1
    %14 = vsyncpa %s13, 0
    loop: start=0, step=1, limit=5
    $region2: #{tpu_custom_call.1} parent=1 // loop_pre_header
      _
    $region3: #{tpu_custom_call.1} parent=1 // loop_header
      %s16 = sphi 0, %s20
      %p17 = scmp.ge.s32.totalorder %s16, 5
      %s24 = sphi 0, %s24
      %s26 = sphi 0, %s24
      %s27 = sphi 0, %s26
      %s41 = sphi 0, %s27
      %s47 = sphi 0, %s49
      %s50 = sphi 0, %s47
      %s51 = sphi 0, %s50
      %s67 = sphi 0, %s51
      %s73 = sphi 0, %s75
      %s76 = sphi 0, %s73
      %s77 = sphi 0, %s76
      %s93 = sphi 0, %s77
      %s99 = sphi 0, %s101
      %s102 = sphi 0, %s99
      %s103 = sphi 0, %s102
      %s119 = sphi 0, %s103
    $region4: #{tpu_custom_call.1} parent=1 // loop_header_branch
      %19 = sbr.rel (%p17) target = $region8
    $region5: #{tpu_custom_call.1} parent=1 // loop_body
      %s21 = ssub.s32 %s16, 1
      %s22 = ssub.s32 %s16, 2
      %s23 = sadd.s32 %s16, 1
      %s25 = sadd.s32 %s24, 1
      %p28 = scmp.eq.s32.totalorder %s16, 2
      %p29 = scmp.ne.s32.totalorder %s24, %s26
      %p30 = scmp.eq.s32.totalorder %s16, 0
      %p31 = por %p29, %p30
      %p32 = scmp.ne.s32.totalorder %s24, %s26
      %p33 = scmp.eq.s32.totalorder %s21, 2
      %p34 = por %p32, %p33
      %p35 = scmp.ne.s32.totalorder %s26, %s27
      %p36 = scmp.eq.s32.totalorder %s21, 0
      %p37 = por %p35, %p36
      %p38 = scmp.ne.s32.totalorder %s26, %s27
      %p39 = scmp.eq.s32.totalorder %s22, 2
      %p40 = por %p38, %p39
      %p42 = scmp.ne.s32.totalorder %s27, %s41
      %p43 = scmp.eq.s32.totalorder %s22, 0
      %p44 = por %p42, %p43
      %s45 = ssub.s32 %s16, %s23
      %p46 = scmp.eq.s32.totalorder %s45, 0
      %s48 = sadd.s32 %s47, 1
      %s49 = scalar_select %p46, %s47, %s48
      %p52 = pneg %p46
      %p53 = scmp.eq.s32.totalorder %s16, 2
      %p54 = por %p52, %p53
      %p55 = scmp.ne.s32.totalorder %s47, %s50
      %p56 = scmp.eq.s32.totalorder %s16, 0
      %p57 = por %p55, %p56
      %p58 = scmp.ne.s32.totalorder %s47, %s50
      %p59 = scmp.eq.s32.totalorder %s21, 2
      %p60 = por %p58, %p59
      %p61 = scmp.ne.s32.totalorder %s50, %s51
      %p62 = scmp.eq.s32.totalorder %s21, 0
      %p63 = por %p61, %p62
      %p64 = scmp.ne.s32.totalorder %s50, %s51
      %p65 = scmp.eq.s32.totalorder %s22, 2
      %p66 = por %p64, %p65
      %p68 = scmp.ne.s32.totalorder %s51, %s67
      %p69 = scmp.eq.s32.totalorder %s22, 0
      %p70 = por %p68, %p69
      %s71 = ssub.s32 %s16, %s23
      %p72 = scmp.eq.s32.totalorder %s71, 0
      %s74 = sadd.s32 %s73, 1
      %s75 = scalar_select %p72, %s73, %s74
      %p78 = pneg %p72
      %p79 = scmp.eq.s32.totalorder %s16, 2
      %p80 = por %p78, %p79
      %p81 = scmp.ne.s32.totalorder %s73, %s76
      %p82 = scmp.eq.s32.totalorder %s16, 0
      %p83 = por %p81, %p82
      %p84 = scmp.ne.s32.totalorder %s73, %s76
      %p85 = scmp.eq.s32.totalorder %s21, 2
      %p86 = por %p84, %p85
      %p87 = scmp.ne.s32.totalorder %s76, %s77
      %p88 = scmp.eq.s32.totalorder %s21, 0
      %p89 = por %p87, %p88
      %p90 = scmp.ne.s32.totalorder %s76, %s77
      %p91 = scmp.eq.s32.totalorder %s22, 2
      %p92 = por %p90, %p91
      %p94 = scmp.ne.s32.totalorder %s77, %s93
      %p95 = scmp.eq.s32.totalorder %s22, 0
      %p96 = por %p94, %p95
      %s97 = ssub.s32 %s16, %s23
      %p98 = scmp.eq.s32.totalorder %s97, 0
      %s100 = sadd.s32 %s99, 1
      %s101 = scalar_select %p98, %s99, %s100
      %p104 = pneg %p98
      %p105 = scmp.eq.s32.totalorder %s16, 2
      %p106 = por %p104, %p105
      %p107 = scmp.ne.s32.totalorder %s99, %s102
      %p108 = scmp.eq.s32.totalorder %s16, 0
      %p109 = por %p107, %p108
      %p110 = scmp.ne.s32.totalorder %s99, %s102
      %p111 = scmp.eq.s32.totalorder %s21, 2
      %p112 = por %p110, %p111
      %p113 = scmp.ne.s32.totalorder %s102, %s103
      %p114 = scmp.eq.s32.totalorder %s21, 0
      %p115 = por %p113, %p114
      %p116 = scmp.ne.s32.totalorder %s102, %s103
      %p117 = scmp.eq.s32.totalorder %s22, 2
      %p118 = por %p116, %p117
      %p120 = scmp.ne.s32.totalorder %s103, %s119
      %p121 = scmp.eq.s32.totalorder %s22, 0
      %p122 = por %p120, %p121
      %p123 = scmp.le.s32.totalorder 1, %s16
      %p124 = scmp.lt.s32.totalorder %s16, 4
      %p125 = pnand %p123, %p124
      %p126 = pneg %p125
      // Predicated region
      $region9: #{tpu_custom_call.1} parent=5 // pred_check
        _
      $region10: #{tpu_custom_call.1} parent=5 // pred_check_branch
        %128 = sbr.rel (%p125) target = $region12
      $region11: #{tpu_custom_call.1} parent=5 // pred_region
        %s129 = ssub.s32 %s16, 1
        // Predicated region
        $region13: #{tpu_custom_call.1} parent=11 // pred_check
          %p130 = pneg %p37
        $region14: #{tpu_custom_call.1} parent=11 // pred_check_branch
          %132 = sbr.rel (%p130) target = $region16
        $region15: #{tpu_custom_call.1} parent=11 // pred_region
          %s134 = ssub.s32 128, 128
          %135 = vsyncadd [#allocation3], %s134
          %s136 = sshll.u32 [#allocation2], 4
          %s137 = int_to_ptr.vmem [resolvable:$true] %s136
          %142 = dma.hbm_to_vmem [thread:$0]  %s0, 128, %s137, [#allocation3], 64, 64, 4
        $region16: #{tpu_custom_call.1} parent=11 // pred_fallthru
          _
      $region12: #{tpu_custom_call.1} parent=5 // pred_fallthru
        _
      %p143 = scmp.lt.s32.totalorder %s16, 3
      // Predicated region
      $region17: #{tpu_custom_call.1} parent=5 // pred_check
        %p144 = pneg %p143
      $region18: #{tpu_custom_call.1} parent=5 // pred_check_branch
        %146 = sbr.rel (%p144) target = $region20
      $region19: #{tpu_custom_call.1} parent=5 // pred_region
        // Predicated region
        $region21: #{tpu_custom_call.1} parent=19 // pred_check
          %p147 = pneg %p57
        $region22: #{tpu_custom_call.1} parent=19 // pred_check_branch
          %149 = sbr.rel (%p147) target = $region24
        $region23: #{tpu_custom_call.1} parent=19 // pred_region
          %s150 = sand.u32 %s16, 1
          %s151 = scalar_lea.sflag [#allocation6], %s150
          %s152 = sand.u32 %s47, 1
          %s153 = smul.addr %s152, 16
          %s154 = scalar_lea.vmem [#allocation5], %s153
          %s156 = ssub.s32 256, 256
          %157 = vsyncadd %s151, %s156
          %s158 = smul.addr %s16, 128
          %s159 = scalar_lea.hbm %s1, %s158
          %s160 = sshll.u32 %s154, 4
          %s161 = int_to_ptr.vmem [resolvable:$true] %s160
          %166 = dma.hbm_to_vmem [thread:$0]  %s159, 256, %s161, %s151, 384, 128, 8
        $region24: #{tpu_custom_call.1} parent=19 // pred_fallthru
          _
        // Predicated region
        $region25: #{tpu_custom_call.1} parent=19 // pred_check
          %p167 = pneg %p83
        $region26: #{tpu_custom_call.1} parent=19 // pred_check_branch
          %169 = sbr.rel (%p167) target = $region28
        $region27: #{tpu_custom_call.1} parent=19 // pred_region
          %s170 = sand.u32 %s16, 1
          %s171 = scalar_lea.sflag [#allocation6], %s170
          %s172 = sand.u32 %s73, 1
          %s173 = smul.addr %s172, 64
          %s174 = scalar_lea.vmem [#allocation7], %s173
          %s176 = ssub.s32 1024, 1024
          %177 = vsyncadd %s171, %s176
          %s178 = smul.addr %s16, 64
          %s179 = scalar_lea.hbm %s2, %s178
          %s180 = sshll.u32 %s174, 4
          %s181 = int_to_ptr.vmem [resolvable:$true] %s180
          %186 = dma.hbm_to_vmem [thread:$0]  %s179, 1024, %s181, %s171, 192, 64, 4
        $region28: #{tpu_custom_call.1} parent=19 // pred_fallthru
          _
      $region20: #{tpu_custom_call.1} parent=5 // pred_fallthru
        _
      %p187 = scmp.le.s32.totalorder 1, %s16
      %p188 = scmp.lt.s32.totalorder %s16, 4
      %p189 = pnand %p187, %p188
      %p190 = pneg %p189
      // Predicated region
      $region29: #{tpu_custom_call.1} parent=5 // pred_check
        _
      $region30: #{tpu_custom_call.1} parent=5 // pred_check_branch
        %192 = sbr.rel (%p189) target = $region32
      $region31: #{tpu_custom_call.1} parent=5 // pred_region
        %s193 = ssub.s32 %s16, 1
        // Predicated region
        $region33: #{tpu_custom_call.1} parent=31 // pred_check
          %p194 = pneg %p37
        $region34: #{tpu_custom_call.1} parent=31 // pred_check_branch
          %196 = sbr.rel (%p194) target = $region36
        $region35: #{tpu_custom_call.1} parent=31 // pred_region
          %197 = dma.done [#allocation3], 128
        $region36: #{tpu_custom_call.1} parent=31 // pred_fallthru
          _
        %s198 = sand.u32 %s21, 1
        %s199 = scalar_lea.sflag [#allocation6], %s198
        %s200 = sand.u32 %s50, 1
        %s201 = smul.addr %s200, 16
        %s202 = scalar_lea.vmem [#allocation5], %s201
        // Predicated region
        $region37: #{tpu_custom_call.1} parent=31 // pred_check
          %p203 = pneg %p63
        $region38: #{tpu_custom_call.1} parent=31 // pred_check_branch
          %205 = sbr.rel (%p203) target = $region40
        $region39: #{tpu_custom_call.1} parent=31 // pred_region
          %206 = dma.done %s199, 256
        $region40: #{tpu_custom_call.1} parent=31 // pred_fallthru
          _
        %s207 = sand.u32 %s21, 1
        %s208 = scalar_lea.sflag [#allocation6], %s207
        %s209 = sand.u32 %s76, 1
        %s210 = smul.addr %s209, 64
        %s211 = scalar_lea.vmem [#allocation7], %s210
        // Predicated region
        $region41: #{tpu_custom_call.1} parent=31 // pred_check
          %p212 = pneg %p89
        $region42: #{tpu_custom_call.1} parent=31 // pred_check_branch
          %214 = sbr.rel (%p212) target = $region44
        $region43: #{tpu_custom_call.1} parent=31 // pred_region
          %215 = dma.done %s208, 1024
        $region44: #{tpu_custom_call.1} parent=31 // pred_fallthru
          _
        %p216 = pneg %p37
        %p217 = pneg %p34
        %s218 = sand.u32 %s21, 1
        %s219 = scalar_lea.sflag [#allocation6], %s218
        %s220 = sand.u32 %s50, 1
        %s221 = smul.addr %s220, 16
        %s222 = scalar_lea.vmem [#allocation5], %s221
        %p223 = pneg %p63
        %p224 = pneg %p60
        %s225 = sand.u32 %s21, 1
        %s226 = scalar_lea.sflag [#allocation6], %s225
        %s227 = sand.u32 %s76, 1
        %s228 = smul.addr %s227, 64
        %s229 = scalar_lea.vmem [#allocation7], %s228
        %p230 = pneg %p89
        %p231 = pneg %p86
        %p232 = pneg %p115
        %p233 = pneg %p112
        %s234 = sand.u32 %s102, 1
        %s235 = scalar_lea.sflag [#allocation4], %s234
        %s236 = sand.u32 %s102, 1
        %s237 = smul.addr %s236, 16
        %s238 = scalar_lea.vmem [#allocation8], %s237
        %v240 = vld [vmem:[#allocation2] sm:$0xf]
        %v241 = vld [vmem:[#allocation2 + $0x4] sm:$0xf]
        %v242 = vld [vmem:[%s211] sm:$0xf]
        %v243 = vld [vmem:[%s211 + $0x4] sm:$0xf]
        %v244 = vld [vmem:[%s211 + $0x8] sm:$0xf]
        %v245 = vld [vmem:[%s211 + $0xc] sm:$0xf]
        %v246 = vld [vmem:[%s211 + $0x10] sm:$0xf]
        %v247 = vld [vmem:[%s211 + $0x14] sm:$0xf]
        %v248 = vld [vmem:[%s211 + $0x18] sm:$0xf]
        %v249 = vld [vmem:[%s211 + $0x1c] sm:$0xf]
        %v250 = vld [vmem:[%s211 + $0x20] sm:$0xf]
        %v251 = vld [vmem:[%s211 + $0x24] sm:$0xf]
        %v252 = vld [vmem:[%s211 + $0x28] sm:$0xf]
        %v253 = vld [vmem:[%s211 + $0x2c] sm:$0xf]
        %v254 = vld [vmem:[%s211 + $0x30] sm:$0xf]
        %v255 = vld [vmem:[%s211 + $0x34] sm:$0xf]
        %v256 = vld [vmem:[%s211 + $0x38] sm:$0xf]
        %v257 = vld [vmem:[%s211 + $0x3c] sm:$0xf]
        %v258 = vld [vmem:[%s202] sm:$0xff]
        %v259 = vld [vmem:[%s202 + $0x8] sm:$0xff]
        %v262 = vunpack.c.l.b16 %v240
        %v263 = vunpack.c.l.b16 %v241
        %v264 = vpack.c.b16 %v263, %v262
        %v282 = vunpack.c.l.b16 %v242
        %v283 = vunpack.c.l.b16 %v243
        %v284 = vunpack.c.l.b16 %v244
        %v285 = vunpack.c.l.b16 %v245
        %v286 = vunpack.c.l.b16 %v246
        %v287 = vunpack.c.l.b16 %v247
        %v288 = vunpack.c.l.b16 %v248
        %v289 = vunpack.c.l.b16 %v249
        %v290 = vunpack.c.l.b16 %v250
        %v291 = vunpack.c.l.b16 %v251
        %v292 = vunpack.c.l.b16 %v252
        %v293 = vunpack.c.l.b16 %v253
        %v294 = vunpack.c.l.b16 %v254
        %v295 = vunpack.c.l.b16 %v255
        %v296 = vunpack.c.l.b16 %v256
        %v297 = vunpack.c.l.b16 %v257
        %v298 = vpack.c.b16 %v283, %v282
        %v299 = vpack.c.b16 %v285, %v284
        %v300 = vpack.c.b16 %v287, %v286
        %v301 = vpack.c.b16 %v289, %v288
        %v302 = vpack.c.b16 %v291, %v290
        %v303 = vpack.c.b16 %v293, %v292
        %v304 = vpack.c.b16 %v295, %v294
        %v305 = vpack.c.b16 %v297, %v296
        %314 = vmatprep.subr.bf16.mxu0 0
        %315 = vmatpush1.bf16.msra.mxu0 %v298
        %316 = vmatprep.subr.bf16.mxu0 0
        %317 = vmatpush1.bf16.msra.mxu0 %v299
        %318 = vmatprep.subr.bf16.mxu0 0
        %319 = vmatpush1.bf16.msra.mxu0 %v300
        %320 = vmatprep.subr.bf16.mxu0 0
        %321 = vmatpush1.bf16.msra.mxu0 %v301
        %322 = vmatprep.subr.bf16.mxu0 0
        %323 = vmatpush1.bf16.msra.mxu0 %v302
        %324 = vmatprep.subr.bf16.mxu0 0
        %325 = vmatpush1.bf16.msra.mxu0 %v303
        %326 = vmatprep.subr.bf16.mxu0 0
        %327 = vmatpush1.bf16.msra.mxu0 %v304
        %328 = vmatprep.subr.bf16.mxu0 0
        %329 = vmatpush1.bf16.msra.mxu0 %v305
        %330 = vmatprep.subr.bf16.mxu0 0
        %331 = vmatpush1.bf16.msra.mxu0 0
        %332 = vmatprep.subr.bf16.mxu0 0
        %333 = vmatpush1.bf16.msra.mxu0 0
        %334 = vmatprep.subr.bf16.mxu0 0
        %335 = vmatpush1.bf16.msra.mxu0 0
        %336 = vmatprep.subr.bf16.mxu0 0
        %337 = vmatpush1.bf16.msra.mxu0 0
        %338 = vmatprep.subr.bf16.mxu0 0
        %339 = vmatpush1.bf16.msra.mxu0 0
        %340 = vmatprep.subr.bf16.mxu0 0
        %341 = vmatpush1.bf16.msra.mxu0 0
        %342 = vmatprep.subr.bf16.mxu0 0
        %343 = vmatpush1.bf16.msra.mxu0 0
        %344 = vmatprep.subr.bf16.mxu0 0
        %345 = vmatpush1.bf16.msra.mxu0 0
        %346 = vmatprep.mubr.bf16.mxu0 0
        %347 = vmatmul.mubr.bf16.gmra.mrb[0].mxu0 %v264
        %v348 = vpop.f32.mrb[0].mxu0
        %v349 = vadd.f32 %v258, %v348
        %v350 = vpop.f32.mrb[0].mxu0
        %v351 = vpop.f32.mrb[0].mxu0
        %v352 = vadd.f32 %v259, %v351
        %v353 = vpop.f32.mrb[0].mxu0
        %354 = vdwg.mxu0
        %v355 = vadd.f32 %v349, %v352
        %v356 = vrot.slane %v355, 4
        %v357 = vadd.f32 %v355, %v356
        %v358 = vrot.slane %v357, 2
        %v359 = vadd.f32 %v357, %v358
        %v360 = vrot.slane %v359, 1
        %v361 = vadd.f32 %v359, %v360
        %v362 = vmul.f32 %v361, 0.0625
        %v363 = vsub.f32 %v349, %v362
        %v364 = vsub.f32 %v352, %v362
        %v365 = vmul.f32 %v363, %v363
        %v366 = vmul.f32 %v364, %v364
        %v367 = vadd.f32 %v365, %v366
        %v368 = vrot.slane %v367, 4
        %v369 = vadd.f32 %v367, %v368
        %v370 = vrot.slane %v369, 2
        %v371 = vadd.f32 %v369, %v370
        %v372 = vrot.slane %v371, 1
        %v373 = vadd.f32 %v371, %v372
        %v374 = vmul.f32 %v373, 0.06666667
        %v375 = vrsqrt.pop %v374
        %v376 = vmul.f32 %v374, %v375
        %vm377 = vcmp.eq.f32.partialorder %v374, inf
        %v378 = vsel %vm377, %v374, %v376
        %vm379 = vcmp.eq.f32.partialorder %v374, 0.0
        %v380 = vand.u32 %v374, 2147483648
        %v381 = vsel %vm379, %v380, %v378
        %v382 = vadd.f32 %v381, 1e-06
        %v383 = vrcp.pop %v382
        %v384 = vmul.f32 %v363, %v383
        %v385 = vmul.f32 %v364, %v383
        %v386 = vxor.u32 %v384, 2147483648
        %v387 = vxor.u32 %v385, 2147483648
        %v388 = vmul.f32 %v386, 1.442695
        %v389 = vpow.pop %v388
        %v390 = vmul.f32 %v387, 1.442695
        %v391 = vpow.pop %v390
        %v392 = vadd.f32 %v389, 1.0
        %v393 = vadd.f32 %v391, 1.0
        %v394 = vrcp.pop %v392
        %v395 = vmul.f32 1.0, %v394
        %v396 = vrcp.pop %v393
        %v397 = vmul.f32 1.0, %v396
        %398 = vst [vmem:[%s238] sm:$0xff] %v395
        %399 = vst [vmem:[%s238 + $0x8] sm:$0xff] %v397
        %s400 = sand.u32 %s102, 1
        %s401 = scalar_lea.sflag [#allocation4], %s400
        %s402 = sand.u32 %s102, 1
        %s403 = smul.addr %s402, 16
        %s404 = scalar_lea.vmem [#allocation8], %s403
        // Predicated region
        $region45: #{tpu_custom_call.1} parent=31 // pred_check
          %p405 = pneg %p112
        $region46: #{tpu_custom_call.1} parent=31 // pred_check_branch
          %407 = sbr.rel (%p405) target = $region48
        $region47: #{tpu_custom_call.1} parent=31 // pred_region
          %s409 = ssub.s32 256, 256
          %410 = vsyncadd %s401, %s409
          %s411 = smul.addr %s21, 128
          %s412 = scalar_lea.hbm %s3, %s411
          %s413 = sshll.u32 %s404, 4
          %s414 = int_to_ptr.vmem [resolvable:$true] %s413
          %419 = dma.vmem_to_hbm [thread:$0]  %s414, 256, %s412, %s401, 128, 384, 8
        $region48: #{tpu_custom_call.1} parent=31 // pred_fallthru
          _
      $region32: #{tpu_custom_call.1} parent=5 // pred_fallthru
        _
      %p420 = scmp.le.s32.totalorder 2, %s16
      // Predicated region
      $region49: #{tpu_custom_call.1} parent=5 // pred_check
        %p421 = pneg %p420
      $region50: #{tpu_custom_call.1} parent=5 // pred_check_branch
        %423 = sbr.rel (%p421) target = $region52
      $region51: #{tpu_custom_call.1} parent=5 // pred_region
        %s424 = ssub.s32 %s16, 2
        // Predicated region
        $region53: #{tpu_custom_call.1} parent=51 // pred_check
          %p425 = pneg %p118
        $region54: #{tpu_custom_call.1} parent=51 // pred_check_branch
          %427 = sbr.rel (%p425) target = $region56
        $region55: #{tpu_custom_call.1} parent=51 // pred_region
          %s428 = sand.u32 %s103, 1
          %s429 = scalar_lea.sflag [#allocation4], %s428
          %s430 = sand.u32 %s103, 1
          %s431 = smul.addr %s430, 16
          %s432 = scalar_lea.vmem [#allocation8], %s431
          %433 = dma.done %s429, 256
        $region56: #{tpu_custom_call.1} parent=51 // pred_fallthru
          _
      $region52: #{tpu_custom_call.1} parent=5 // pred_fallthru
        _
    $region6: #{tpu_custom_call.1} parent=1 // loop_footer
      %s20 = sadd.s32 1, %s16
    $region7: #{tpu_custom_call.1} parent=1 // loop_footer_branch
      %15 = sbr.rel target = $region3
    $region8: #{tpu_custom_call.1} parent=1 // loop_exit
      _
    %434 = vsyncpa [#allocation3], 1
    %s435 = scalar_lea.sflag [#allocation3], 1
    %436 = vsyncpa %s435, 1
    %437 = vsyncpa [#allocation6], 1
    %s438 = scalar_lea.sflag [#allocation6], 1
    %439 = vsyncpa %s438, 1
    %440 = vsyncpa [#allocation4], 1
    %s441 = scalar_lea.sflag [#allocation4], 1
    %442 = vsyncpa %s441, 1

</llo_original>
